<compile_context>
chip_gen: v7x
topology: tpu7x:2x2x1
jax: 0.10.0
libtpu: 0.0.40
codegen_flags: <defaults>
</compile_context>

<pallas_src>
import functools

import jax
import jax.numpy as jnp
from jax.experimental import pallas as pl
from jax.experimental.pallas import tpu as pltpu

EPS = 1e-5  # nn.BatchNorm2d default eps


# ----------------------------------------------------------------------------------
# Kernel 1: conv1 (3x3, both heads fused along output channels) computed directly
# from a haloed row-block slab + BN1 partial statistics.
#   x_ref   : (Cin, (RT+2)*(W+2)+2) bf16   haloed, spatially padded slab (flat pixels)
#   w1_ref  : (9, 2C, Cin)          bf16   tap-major conv1 weights, t = dy*3+dx
#   mask_ref: (1, RT*(W+2))         f32    1 for real pixels, 0 for the 2 junk cols/row
#   y1_ref  : (2C, RT*(W+2))        bf16   pre-BN conv1 output (junk cols zeroed)
#   st_ref  : (2C, 2)               f32    per-tile [sum, sum_sq] per channel
# ----------------------------------------------------------------------------------
def conv1_stats_kernel(x_ref, w1_ref, mask_ref, y1_ref, st_ref, *, wpad, lo):
    c2 = w1_ref.shape[1]
    acc = jnp.zeros((c2, lo), jnp.float32)
    # 9 taps = 9 static lane-offset slices of the flat slab; offsets o = dy*(W+2)+dx.
    for t in range(9):
        dy, dx = divmod(t, 3)
        o = dy * wpad + dx
        acc = acc + jnp.dot(w1_ref[t], x_ref[:, o:o + lo],
                            preferred_element_type=jnp.float32)
    y1 = acc * mask_ref[...]            # zero the junk columns -> exact BN1 stats and
    y1_ref[...] = y1.astype(y1_ref.dtype)   # a known constant downstream in pass 2.
    st_ref[:, 0:1] = jnp.sum(y1, axis=1, keepdims=True)
    st_ref[:, 1:2] = jnp.sum(y1 * y1, axis=1, keepdims=True)


# ----------------------------------------------------------------------------------
# Kernel 2: BN1-apply + ReLU + bias-free conv2 (4 offsets x 2 heads in one
# block-diagonal matmul), accumulating BN2 partial statistics only.  No mask: the
# junk columns contribute a constant that is corrected on the host.
# ----------------------------------------------------------------------------------
def bn2_stats_kernel(y1_ref, aff1_ref, w2_ref, st_ref):
    z1 = jnp.maximum(y1_ref[...].astype(jnp.float32) * aff1_ref[:, 0:1]
                     + aff1_ref[:, 1:2], 0.0)
    y2c = jnp.dot(w2_ref[...], z1.astype(jnp.bfloat16),
                  preferred_element_type=jnp.float32)          # (8C, Lo), bias-free
    st_ref[:, 0:1] = jnp.sum(y2c, axis=1, keepdims=True)
    st_ref[:, 1:2] = jnp.sum(y2c * y2c, axis=1, keepdims=True)


# ----------------------------------------------------------------------------------
# Kernel 3: full apply path, lane-dense output rows (pixels on lanes):
#   rows  0..15 : shrink map    (head 0), offsets (a,b,c,d)
#   rows 16..31 : threshold map (head 1)
#   rows 32..47 : binary map = sigmoid(k * (shrink - thresh))   (fused DB step)
# ----------------------------------------------------------------------------------
def db_apply_kernel(y1_ref, aff1_ref, w2_ref, aff2_ref, w3_ref, b3_ref, out_ref, *, k):
    z1 = jnp.maximum(y1_ref[...].astype(jnp.float32) * aff1_ref[:, 0:1]
                     + aff1_ref[:, 1:2], 0.0)
    y2c = jnp.dot(w2_ref[...], z1.astype(jnp.bfloat16),
                  preferred_element_type=jnp.float32)          # (8C, Lo)
    z2 = jnp.maximum(y2c * aff2_ref[:, 0:1] + aff2_ref[:, 1:2], 0.0)
    v = jnp.dot(w3_ref[...], z2.astype(jnp.bfloat16),
                preferred_element_type=jnp.float32) + b3_ref[...]   # (32, Lo)
    sig = jax.nn.sigmoid(v)
    out_ref[0:32, :] = sig
    out_ref[32:48, :] = jax.nn.sigmoid(k * (sig[0:16, :] - sig[16:32, :]))


# ----------------------------------------------------------------------------------
# Host glue: weight packing, haloed-slab construction, tiny BN reductions, reassembly.
# ----------------------------------------------------------------------------------
def _pack_params(pb, pt, cin, cmid):
    C, C2 = cmid, 2 * cmid
    f32, bf16 = jnp.float32, jnp.bfloat16
    # conv1: both heads concatenated along output channels -> (9, 2C, Cin), t = dy*3+dx
    w1 = jnp.concatenate([pb["w1"], pt["w1"]], axis=-1)             # (3,3,Cin,2C)
    w1p = w1.reshape(9, cin, C2).transpose(0, 2, 1).astype(bf16)    # (9, 2C, Cin)
    g1 = jnp.concatenate([pb["g1"], pt["g1"]]).astype(f32)
    b1 = jnp.concatenate([pb["b1"], pt["b1"]]).astype(f32)

    # conv2: block-diagonal (heads) x 4 offsets along output rows -> (8C, 2C)
    # row index = ab*2C + head*C + channel
    zc = jnp.zeros((C, C), f32)
    rows = []
    for ab in range(4):
        a, b = divmod(ab, 2)
        rows.append(jnp.concatenate([pb["w2"][a, b].T, zc], axis=1))  # head 0 rows
        rows.append(jnp.concatenate([zc, pt["w2"][a, b].T], axis=1))  # head 1 rows
    w2big = jnp.concatenate(rows, axis=0).astype(bf16)                # (8C, 2C)
    b2ch = jnp.concatenate([pb["bias2"], pt["bias2"]]).astype(f32)    # (2C,)
    g2 = jnp.concatenate([pb["g2"], pt["g2"]]).astype(f32)
    bt2 = jnp.concatenate([pb["bt2"], pt["bt2"]]).astype(f32)

    # conv3: 2 heads x 4 ab-offsets x 4 cd-offsets = 32 output rows over 8C inputs
    w3big = jnp.zeros((32, 8 * C), f32)
    for h, p in enumerate((pb, pt)):
        for ab in range(4):
            for cd in range(4):
                c, d = divmod(cd, 2)
                q = h * 16 + ab * 4 + cd
                col0 = ab * C2 + h * C
                w3big = w3big.at[q, col0:col0 + C].set(p["w3"][c, d])
    w3big = w3big.astype(bf16)
    b3big = jnp.concatenate([jnp.broadcast_to(pb["b3"], (16, 1)),
                             jnp.broadcast_to(pt["b3"], (16, 1))], axis=0).astype(f32)
    return w1p, g1, b1, w2big, b2ch, g2, bt2, w3big, b3big


def _pick_block_rows(h, wpad, target_lanes=2048):
    """Largest divisor of H whose flat lane width RT*(W+2) stays <= target_lanes."""
    best = 1
    for rt in range(1, h + 1):
        if h % rt == 0 and rt * wpad <= target_lanes:
            best = rt
    return best


def db_head_forward(x_nchw, p_binarize, p_thresh, k=50.0, block_rows=None):
    """Training-mode DBHead forward. Returns {'maps': (N, 3, 4H, 4W)} float32."""
    N, Cin, H, W = x_nchw.shape
    C = p_binarize["w1"].shape[-1]
    C2, C8 = 2 * C, 8 * C
    Wp = W + 2
    RT = block_rows if block_rows is not None else _pick_block_rows(H, Wp)
    assert H % RT == 0, "block_rows must divide H"   # TODO(synk): remainder block
    NRB = H // RT
    NB = N * NRB            # grid length; prefer an even NB for v7x 2-TC balance
    LO = RT * Wp            # per-tile lanes (W real + 2 junk cols per image row)
    LSLAB = (RT + 2) * Wp + 2   # haloed slab + 2-lane guard so junk taps never OOB
    NHW = N * H * W

    # ---- glue: padded bf16 activation -> haloed row-block slabs (~1.4x, not 9x) ----
    xpad = jnp.pad(x_nchw.astype(jnp.bfloat16), ((0, 0), (0, 0), (1, 1), (1, 1)))
    xslab = jnp.stack([xpad[:, :, rb * RT:rb * RT + RT + 2, :] for rb in range(NRB)],
                      axis=1)                              # (N, NRB, Cin, RT+2, W+2)
    xslab = xslab.reshape(NB, Cin, (RT + 2) * Wp)
    xslab = jnp.pad(xslab, ((0, 0), (0, 0), (0, 2)))       # flat guard lanes (zeros)

    lane = jnp.arange(LO)
    mask = (lane % Wp < W).astype(jnp.float32).reshape(1, LO)

    w1p, g1, b1, w2big, b2ch, g2, bt2, w3big, b3big = _pack_params(
        p_binarize, p_thresh, Cin, C)

    cparams = pltpu.CompilerParams(
        dimension_semantics=("parallel",),            # row-block tiles are independent
        vmem_limit_bytes=48 * 1024 * 1024)            # headroom under v7x's 64 MiB

    # ---- pass 1: conv1 (from haloed slab) + BN1 partial stats; y1 stored bf16 ----
    y1, st1 = pl.pallas_call(
        functools.partial(conv1_stats_kernel, wpad=Wp, lo=LO),
        out_shape=(jax.ShapeDtypeStruct((NB, C2, LO), jnp.bfloat16),
                   jax.ShapeDtypeStruct((NB, C2, 2), jnp.float32)),
        grid=(NB,),
        in_specs=[pl.BlockSpec((None, Cin, LSLAB), lambda b: (b, 0, 0)),
                  pl.BlockSpec((9, C2, Cin), lambda b: (0, 0, 0)),
                  pl.BlockSpec((1, LO), lambda b: (0, 0))],
        out_specs=(pl.BlockSpec((None, C2, LO), lambda b: (b, 0, 0)),
                   pl.BlockSpec((None, C2, 2), lambda b: (b, 0, 0))),
        compiler_params=cparams,
    )(xslab, w1p, mask)

    s1 = jnp.sum(st1, axis=0)                         # (2C, 2)
    mu1 = s1[:, 0] / NHW
    var1 = s1[:, 1] / NHW - mu1 * mu1
    inv1 = jax.lax.rsqrt(var1 + EPS)
    scale1 = g1 * inv1                                # folded BN1 affine
    shift1 = b1 - g1 * mu1 * inv1
    aff1 = jnp.stack([scale1, shift1], axis=1)        # (2C, 2)

    # ---- pass 2: BN2 partial stats of the bias-free conv2 output ----
    st2 = pl.pallas_call(
        bn2_stats_kernel,
        out_shape=jax.ShapeDtypeStruct((NB, C8, 2), jnp.float32),
        grid=(NB,),
        in_specs=[pl.BlockSpec((None, C2, LO), lambda b: (b, 0, 0)),
                  pl.BlockSpec((C2, 2), lambda b: (0, 0)),
                  pl.BlockSpec((C8, C2), lambda b: (0, 0))],
        out_specs=pl.BlockSpec((None, C8, 2), lambda b: (b, 0, 0)),
        compiler_params=cparams,
    )(y1, aff1, w2big)

    # Junk-column correction: zeroed y1 junk lanes become relu(shift1) after BN1, so
    # their (bias-free) conv2 output is one known constant vector.  Subtract it on the
    # host instead of masking (8C, Lo) tensors per tile in the kernel.
    z1pad = jnp.maximum(shift1, 0.0).astype(jnp.bfloat16).astype(jnp.float32)
    pad_vec = w2big.astype(jnp.float32) @ z1pad                       # (8C,)
    n_junk = NB * RT * (Wp - W)                                       # = 2*N*H lanes
    s2 = jnp.sum(st2, axis=0)                                         # (8C, 2)
    sum_c = s2[:, 0] - n_junk * pad_vec
    sq_c = s2[:, 1] - n_junk * pad_vec * pad_vec
    cnt2 = 4.0 * NHW                                  # 4 offsets share a BN2 channel
    mu2c = sum_c.reshape(4, C2).sum(axis=0) / cnt2    # mean of bias-free conv2 output
    var2 = sq_c.reshape(4, C2).sum(axis=0) / cnt2 - mu2c * mu2c
    inv2 = jax.lax.rsqrt(var2 + EPS)
    scale2 = jnp.tile(g2 * inv2, 4)                   # (8C,)  conv2 bias cancels in
    shift2 = jnp.tile(bt2 - g2 * inv2 * mu2c, 4)      #        training-mode BN
    aff2 = jnp.stack([scale2, shift2], axis=1)        # (8C, 2)

    # ---- pass 3: BN1/BN2 apply, conv2, conv3, sigmoid, fused DB step ----
    out = pl.pallas_call(
        functools.partial(db_apply_kernel, k=float(k)),
        out_shape=jax.ShapeDtypeStruct((NB, 48, LO), jnp.float32),
        grid=(NB,),
        in_specs=[pl.BlockSpec((None, C2, LO), lambda b: (b, 0, 0)),
                  pl.BlockSpec((C2, 2), lambda b: (0, 0)),
                  pl.BlockSpec((C8, C2), lambda b: (0, 0)),
                  pl.BlockSpec((C8, 2), lambda b: (0, 0)),
                  pl.BlockSpec((32, C8), lambda b: (0, 0)),
                  pl.BlockSpec((32, 1), lambda b: (0, 0))],
        out_specs=pl.BlockSpec((None, 48, LO), lambda b: (b, 0, 0)),
        compiler_params=cparams,
    )(y1, aff1, w2big, aff2, w3big, b3big)

    # ---- glue: (NB, 48, Lo) -> (N, 3, 4H, 4W), dropping the 2 junk cols per row ----
    # out[(n, rb), m*16+a*8+b*4+c*2+d, ri*(W+2)+j] -> maps[n, m, 4*(rb*RT+ri)+2a+c, 4j+2b+d]
    out6 = out.reshape(N, NRB, 3, 2, 2, 2, 2, RT, Wp)[..., :W]
    maps = out6.transpose(0, 2, 1, 7, 3, 5, 8, 4, 6).reshape(N, 3, 4 * H, 4 * W)
    return {"maps": maps}


# ----------------------------------------------------------------------------------
# Deterministic synthetic parameters + plain-JAX reference for validation.
# The reference mirrors the kernel's bf16 roundings with *element-wise* casts only;
# every host-side dot/einsum runs in f32 (the previous run crashed because the CPU
# backend cannot execute bf16 x bf16 -> f32 dots).
# ----------------------------------------------------------------------------------
def make_head_params(key, cin, cmid):
    ks = jax.random.split(key, 9)
    return {
        "w1": 0.2 * jax.random.normal(ks[0], (3, 3, cin, cmid), jnp.float32),
        "g1": 1.0 + 0.1 * jax.random.normal(ks[1], (cmid,), jnp.float32),
        "b1": 0.1 * jax.random.normal(ks[2], (cmid,), jnp.float32),
        "w2": 0.3 * jax.random.normal(ks[3], (2, 2, cmid, cmid), jnp.float32),
        "bias2": 0.05 * jax.random.normal(ks[4], (cmid,), jnp.float32),
        "g2": 1.0 + 0.1 * jax.random.normal(ks[5], (cmid,), jnp.float32),
        "bt2": 0.1 * jax.random.normal(ks[6], (cmid,), jnp.float32),
        "w3": 0.5 * jax.random.normal(ks[7], (2, 2, cmid), jnp.float32),
        "b3": 0.05 * jax.random.normal(ks[8], (), jnp.float32),
    }


def _r(x):
    """bf16 rounding mirror (element-wise round-trip; keeps all dots in f32)."""
    return x.astype(jnp.bfloat16).astype(jnp.float32)


def ref_base_head(x_nchw, p):
    N, Cin, H, W = x_nchw.shape
    xp = _r(jnp.pad(x_nchw.astype(jnp.float32), ((0, 0), (0, 0), (1, 1), (1, 1))))
    w1 = _r(p["w1"])
    y1 = jnp.zeros((N, p["w1"].shape[-1], H, W), jnp.float32)
    for dy in range(3):
        for dx in range(3):
            y1 = y1 + jnp.einsum("nchw,cm->nmhw", xp[:, :, dy:dy + H, dx:dx + W],
                                 w1[dy, dx])
    mu = y1.mean(axis=(0, 2, 3), keepdims=True)
    var = y1.var(axis=(0, 2, 3), keepdims=True)
    y1 = _r(y1)                                   # kernel stores y1 in bf16
    z1 = jnp.maximum(p["g1"].reshape(1, -1, 1, 1) * (y1 - mu) * jax.lax.rsqrt(var + EPS)
                     + p["b1"].reshape(1, -1, 1, 1), 0.0)

    z1 = _r(z1)
    w2 = _r(p["w2"])
    C = z1.shape[1]
    y2 = jnp.zeros((N, C, 2 * H, 2 * W), jnp.float32)
    for a in range(2):
        for b in range(2):
            y2 = y2.at[:, :, a::2, b::2].set(jnp.einsum("nchw,cm->nmhw", z1, w2[a, b]))
    y2 = y2 + p["bias2"].reshape(1, -1, 1, 1)
    mu = y2.mean(axis=(0, 2, 3), keepdims=True)
    var = y2.var(axis=(0, 2, 3), keepdims=True)
    z2 = jnp.maximum(p["g2"].reshape(1, -1, 1, 1) * (y2 - mu) * jax.lax.rsqrt(var + EPS)
                     + p["bt2"].reshape(1, -1, 1, 1), 0.0)

    z2 = _r(z2)
    w3 = _r(p["w3"])
    y3 = jnp.zeros((N, 1, 4 * H, 4 * W), jnp.float32)
    for c in range(2):
        for d in range(2):
            y3 = y3.at[:, 0, c::2, d::2].set(jnp.einsum("nchw,c->nhw", z2, w3[c, d]))
    y3 = y3 + p["b3"]
    return jax.nn.sigmoid(y3)


def ref_db_head(x_nchw, pb, pt, k=50.0):
    shrink = ref_base_head(x_nchw, pb)
    thresh = ref_base_head(x_nchw, pt)
    binary = jax.nn.sigmoid(k * (shrink - thresh))
    return jnp.concatenate([shrink, thresh, binary], axis=1)


if __name__ == "__main__":
    # Small shapes; W=18 makes the flat lane width a non-multiple of 128 and gives 2
    # junk columns per row, so the junk-column correction path is exercised; RT=9
    # gives 4 row-block tiles (even, exercises the multi-tile / "parallel" grid path).
    N, Cin, H, W = 2, 16, 18, 18
    Cmid = Cin // 4
    key = jax.random.PRNGKey(0)
    kx, kb, kt = jax.random.split(key, 3)
    x = jax.random.normal(kx, (N, Cin, H, W), jnp.float32)
    pb = make_head_params(kb, Cin, Cmid)
    pt = make_head_params(kt, Cin, Cmid)

    maps = db_head_forward(x, pb, pt, k=50.0, block_rows=9)["maps"]
    maps = jax.block_until_ready(maps)
    assert maps.shape == (N, 3, 4 * H, 4 * W)

    ref = jax.block_until_ready(ref_db_head(x, pb, pt, k=50.0))
    # shrink/threshold maps: tight check against the rounding-matched f32 reference.
    err_st = float(jnp.max(jnp.abs(maps[:, :2] - ref[:, :2])))
    # binary map: sigmoid(k*(P-T)) with k=50 amplifies ulp-level differences, so its
    # end-to-end tolerance is looser ...
    err_all = float(jnp.max(jnp.abs(maps - ref)))
    # ... and we additionally verify the fused DB step is consistent with the kernel's
    # own shrink/threshold outputs.
    err_step = float(jnp.max(jnp.abs(
        maps[:, 2] - jax.nn.sigmoid(50.0 * (maps[:, 0] - maps[:, 1])))))
    assert err_st < 1e-2, f"shrink/thresh max abs err {err_st}"
    assert err_all < 1e-1, f"maps max abs err {err_all}"
    assert err_step < 5e-4, f"DB step consistency err {err_step}"
    print("KERNEL_OK")
</pallas_src>

<mosaic_0001>
module attributes {stable_mosaic.version = 11 : i64} {
  func.func @conv1_stats_kernel(%arg0: i32, %arg1: memref<1x16x222xbf16, #tpu.memory_space<vmem>>, %arg2: memref<9x8x16xbf16, #tpu.memory_space<vmem>>, %arg3: memref<1x180xf32, #tpu.memory_space<vmem>>, %arg4: memref<1x8x180xbf16, #tpu.memory_space<vmem>>, %arg5: memref<1x8x2xf32, #tpu.memory_space<vmem>>) attributes {dimension_semantics = [#tpu.dimension_semantics<parallel>], iteration_bounds = array<i64: 4>, scalar_prefetch = 0 : i64, scratch_operands = 0 : i64, tpu.core_type = #tpu.core_type<tc>, window_params = [{transform_indices = @transform_0, window_bounds = array<i64: 1, 16, 222>}, {pipeline_mode = #tpu.pipeline_mode<synchronous>, transform_indices = @transform_1, window_bounds = array<i64: 9, 8, 16>}, {pipeline_mode = #tpu.pipeline_mode<synchronous>, transform_indices = @transform_2, window_bounds = array<i64: 1, 180>}, {transform_indices = @transform_3, window_bounds = array<i64: 1, 8, 180>}, {transform_indices = @transform_4, window_bounds = array<i64: 1, 8, 2>}]} {
    %cst = arith.constant 0.000000e+00 : f32
    %0 = vector.broadcast %cst : f32 to vector<8x180xf32>
    %c0 = arith.constant 0 : index
    %c0_0 = arith.constant 0 : index
    %c0_1 = arith.constant 0 : index
    %1 = vector.load %arg2[%c0, %c0_0, %c0_1] : memref<9x8x16xbf16, #tpu.memory_space<vmem>>, vector<1x8x16xbf16>
    %2 = vector.shape_cast %1 : vector<1x8x16xbf16> to vector<8x16xbf16>
    %c0_2 = arith.constant 0 : index
    %c0_3 = arith.constant 0 : index
    %c0_4 = arith.constant 0 : index
    %3 = vector.load %arg1[%c0_2, %c0_3, %c0_4] : memref<1x16x222xbf16, #tpu.memory_space<vmem>>, vector<1x16x180xbf16>
    %4 = vector.shape_cast %3 : vector<1x16x180xbf16> to vector<16x180xbf16>
    %cst_5 = arith.constant dense<0.000000e+00> : vector<8x180xf32>
    %5 = tpu.matmul %2, %4, %cst_5 {dimension_numbers = #tpu.dot_dimension_numbers<[1], [0], [0], [1], [0, 0, 1, 1], [], []>} : vector<8x16xbf16>, vector<16x180xbf16>, vector<8x180xf32> -> vector<8x180xf32>
    %6 = arith.addf %0, %5 : vector<8x180xf32>
    %c1 = arith.constant 1 : index
    %c0_6 = arith.constant 0 : index
    %c0_7 = arith.constant 0 : index
    %7 = vector.load %arg2[%c1, %c0_6, %c0_7] : memref<9x8x16xbf16, #tpu.memory_space<vmem>>, vector<1x8x16xbf16>
    %8 = vector.shape_cast %7 : vector<1x8x16xbf16> to vector<8x16xbf16>
    %c0_8 = arith.constant 0 : index
    %c0_9 = arith.constant 0 : index
    %c1_10 = arith.constant 1 : index
    %9 = vector.load %arg1[%c0_8, %c0_9, %c1_10] : memref<1x16x222xbf16, #tpu.memory_space<vmem>>, vector<1x16x180xbf16>
    %10 = vector.shape_cast %9 : vector<1x16x180xbf16> to vector<16x180xbf16>
    %cst_11 = arith.constant dense<0.000000e+00> : vector<8x180xf32>
    %11 = tpu.matmul %8, %10, %cst_11 {dimension_numbers = #tpu.dot_dimension_numbers<[1], [0], [0], [1], [0, 0, 1, 1], [], []>} : vector<8x16xbf16>, vector<16x180xbf16>, vector<8x180xf32> -> vector<8x180xf32>
    %12 = arith.addf %6, %11 : vector<8x180xf32>
    %c2 = arith.constant 2 : index
    %c0_12 = arith.constant 0 : index
    %c0_13 = arith.constant 0 : index
    %13 = vector.load %arg2[%c2, %c0_12, %c0_13] : memref<9x8x16xbf16, #tpu.memory_space<vmem>>, vector<1x8x16xbf16>
    %14 = vector.shape_cast %13 : vector<1x8x16xbf16> to vector<8x16xbf16>
    %c0_14 = arith.constant 0 : index
    %c0_15 = arith.constant 0 : index
    %c2_16 = arith.constant 2 : index
    %15 = vector.load %arg1[%c0_14, %c0_15, %c2_16] : memref<1x16x222xbf16, #tpu.memory_space<vmem>>, vector<1x16x180xbf16>
    %16 = vector.shape_cast %15 : vector<1x16x180xbf16> to vector<16x180xbf16>
    %cst_17 = arith.constant dense<0.000000e+00> : vector<8x180xf32>
    %17 = tpu.matmul %14, %16, %cst_17 {dimension_numbers = #tpu.dot_dimension_numbers<[1], [0], [0], [1], [0, 0, 1, 1], [], []>} : vector<8x16xbf16>, vector<16x180xbf16>, vector<8x180xf32> -> vector<8x180xf32>
    %18 = arith.addf %12, %17 : vector<8x180xf32>
    %c3 = arith.constant 3 : index
    %c0_18 = arith.constant 0 : index
    %c0_19 = arith.constant 0 : index
    %19 = vector.load %arg2[%c3, %c0_18, %c0_19] : memref<9x8x16xbf16, #tpu.memory_space<vmem>>, vector<1x8x16xbf16>
    %20 = vector.shape_cast %19 : vector<1x8x16xbf16> to vector<8x16xbf16>
    %c0_20 = arith.constant 0 : index
    %c0_21 = arith.constant 0 : index
    %c20 = arith.constant 20 : index
    %21 = vector.load %arg1[%c0_20, %c0_21, %c20] : memref<1x16x222xbf16, #tpu.memory_space<vmem>>, vector<1x16x180xbf16>
    %22 = vector.shape_cast %21 : vector<1x16x180xbf16> to vector<16x180xbf16>
    %cst_22 = arith.constant dense<0.000000e+00> : vector<8x180xf32>
    %23 = tpu.matmul %20, %22, %cst_22 {dimension_numbers = #tpu.dot_dimension_numbers<[1], [0], [0], [1], [0, 0, 1, 1], [], []>} : vector<8x16xbf16>, vector<16x180xbf16>, vector<8x180xf32> -> vector<8x180xf32>
    %24 = arith.addf %18, %23 : vector<8x180xf32>
    %c4 = arith.constant 4 : index
    %c0_23 = arith.constant 0 : index
    %c0_24 = arith.constant 0 : index
    %25 = vector.load %arg2[%c4, %c0_23, %c0_24] : memref<9x8x16xbf16, #tpu.memory_space<vmem>>, vector<1x8x16xbf16>
    %26 = vector.shape_cast %25 : vector<1x8x16xbf16> to vector<8x16xbf16>
    %c0_25 = arith.constant 0 : index
    %c0_26 = arith.constant 0 : index
    %c21 = arith.constant 21 : index
    %27 = vector.load %arg1[%c0_25, %c0_26, %c21] : memref<1x16x222xbf16, #tpu.memory_space<vmem>>, vector<1x16x180xbf16>
    %28 = vector.shape_cast %27 : vector<1x16x180xbf16> to vector<16x180xbf16>
    %cst_27 = arith.constant dense<0.000000e+00> : vector<8x180xf32>
    %29 = tpu.matmul %26, %28, %cst_27 {dimension_numbers = #tpu.dot_dimension_numbers<[1], [0], [0], [1], [0, 0, 1, 1], [], []>} : vector<8x16xbf16>, vector<16x180xbf16>, vector<8x180xf32> -> vector<8x180xf32>
    %30 = arith.addf %24, %29 : vector<8x180xf32>
    %c5 = arith.constant 5 : index
    %c0_28 = arith.constant 0 : index
    %c0_29 = arith.constant 0 : index
    %31 = vector.load %arg2[%c5, %c0_28, %c0_29] : memref<9x8x16xbf16, #tpu.memory_space<vmem>>, vector<1x8x16xbf16>
    %32 = vector.shape_cast %31 : vector<1x8x16xbf16> to vector<8x16xbf16>
    %c0_30 = arith.constant 0 : index
    %c0_31 = arith.constant 0 : index
    %c22 = arith.constant 22 : index
    %33 = vector.load %arg1[%c0_30, %c0_31, %c22] : memref<1x16x222xbf16, #tpu.memory_space<vmem>>, vector<1x16x180xbf16>
    %34 = vector.shape_cast %33 : vector<1x16x180xbf16> to vector<16x180xbf16>
    %cst_32 = arith.constant dense<0.000000e+00> : vector<8x180xf32>
    %35 = tpu.matmul %32, %34, %cst_32 {dimension_numbers = #tpu.dot_dimension_numbers<[1], [0], [0], [1], [0, 0, 1, 1], [], []>} : vector<8x16xbf16>, vector<16x180xbf16>, vector<8x180xf32> -> vector<8x180xf32>
    %36 = arith.addf %30, %35 : vector<8x180xf32>
    %c6 = arith.constant 6 : index
    %c0_33 = arith.constant 0 : index
    %c0_34 = arith.constant 0 : index
    %37 = vector.load %arg2[%c6, %c0_33, %c0_34] : memref<9x8x16xbf16, #tpu.memory_space<vmem>>, vector<1x8x16xbf16>
    %38 = vector.shape_cast %37 : vector<1x8x16xbf16> to vector<8x16xbf16>
    %c0_35 = arith.constant 0 : index
    %c0_36 = arith.constant 0 : index
    %c40 = arith.constant 40 : index
    %39 = vector.load %arg1[%c0_35, %c0_36, %c40] : memref<1x16x222xbf16, #tpu.memory_space<vmem>>, vector<1x16x180xbf16>
    %40 = vector.shape_cast %39 : vector<1x16x180xbf16> to vector<16x180xbf16>
    %cst_37 = arith.constant dense<0.000000e+00> : vector<8x180xf32>
    %41 = tpu.matmul %38, %40, %cst_37 {dimension_numbers = #tpu.dot_dimension_numbers<[1], [0], [0], [1], [0, 0, 1, 1], [], []>} : vector<8x16xbf16>, vector<16x180xbf16>, vector<8x180xf32> -> vector<8x180xf32>
    %42 = arith.addf %36, %41 : vector<8x180xf32>
    %c7 = arith.constant 7 : index
    %c0_38 = arith.constant 0 : index
    %c0_39 = arith.constant 0 : index
    %43 = vector.load %arg2[%c7, %c0_38, %c0_39] : memref<9x8x16xbf16, #tpu.memory_space<vmem>>, vector<1x8x16xbf16>
    %44 = vector.shape_cast %43 : vector<1x8x16xbf16> to vector<8x16xbf16>
    %c0_40 = arith.constant 0 : index
    %c0_41 = arith.constant 0 : index
    %c41 = arith.constant 41 : index
    %45 = vector.load %arg1[%c0_40, %c0_41, %c41] : memref<1x16x222xbf16, #tpu.memory_space<vmem>>, vector<1x16x180xbf16>
    %46 = vector.shape_cast %45 : vector<1x16x180xbf16> to vector<16x180xbf16>
    %cst_42 = arith.constant dense<0.000000e+00> : vector<8x180xf32>
    %47 = tpu.matmul %44, %46, %cst_42 {dimension_numbers = #tpu.dot_dimension_numbers<[1], [0], [0], [1], [0, 0, 1, 1], [], []>} : vector<8x16xbf16>, vector<16x180xbf16>, vector<8x180xf32> -> vector<8x180xf32>
    %48 = arith.addf %42, %47 : vector<8x180xf32>
    %c8 = arith.constant 8 : index
    %c0_43 = arith.constant 0 : index
    %c0_44 = arith.constant 0 : index
    %49 = vector.load %arg2[%c8, %c0_43, %c0_44] : memref<9x8x16xbf16, #tpu.memory_space<vmem>>, vector<1x8x16xbf16>
    %50 = vector.shape_cast %49 : vector<1x8x16xbf16> to vector<8x16xbf16>
    %c0_45 = arith.constant 0 : index
    %c0_46 = arith.constant 0 : index
    %c42 = arith.constant 42 : index
    %51 = vector.load %arg1[%c0_45, %c0_46, %c42] : memref<1x16x222xbf16, #tpu.memory_space<vmem>>, vector<1x16x180xbf16>
    %52 = vector.shape_cast %51 : vector<1x16x180xbf16> to vector<16x180xbf16>
    %cst_47 = arith.constant dense<0.000000e+00> : vector<8x180xf32>
    %53 = tpu.matmul %50, %52, %cst_47 {dimension_numbers = #tpu.dot_dimension_numbers<[1], [0], [0], [1], [0, 0, 1, 1], [], []>} : vector<8x16xbf16>, vector<16x180xbf16>, vector<8x180xf32> -> vector<8x180xf32>
    %54 = arith.addf %48, %53 : vector<8x180xf32>
    %c0_48 = arith.constant 0 : index
    %c0_49 = arith.constant 0 : index
    %55 = vector.load %arg3[%c0_48, %c0_49] : memref<1x180xf32, #tpu.memory_space<vmem>>, vector<1x180xf32>
    %56 = vector.broadcast %55 : vector<1x180xf32> to vector<8x180xf32>
    %57 = arith.mulf %54, %56 : vector<8x180xf32>
    %58 = arith.truncf %57 : vector<8x180xf32> to vector<8x180xbf16>
    %c0_50 = arith.constant 0 : index
    %c0_51 = arith.constant 0 : index
    %c0_52 = arith.constant 0 : index
    %59 = vector.load %arg4[%c0_50, %c0_51, %c0_52] : memref<1x8x180xbf16, #tpu.memory_space<vmem>>, vector<1x8x180xbf16>
    %60 = vector.shape_cast %59 : vector<1x8x180xbf16> to vector<8x180xbf16>
    %61 = vector.shape_cast %58 : vector<8x180xbf16> to vector<1x8x180xbf16>
    tpu.vector_store %arg4[%c0_50, %c0_51, %c0_52], %61 {strides = array<i32>} : memref<1x8x180xbf16, #tpu.memory_space<vmem>>, vector<1x8x180xbf16>,
    %cst_53 = arith.constant dense<0.000000e+00> : vector<8xf32>
    %62 = vector.multi_reduction <add>, %57, %cst_53 [1] : vector<8x180xf32> to vector<8xf32>
    %63 = vector.shape_cast %62 : vector<8xf32> to vector<8x1xf32>
    %c0_54 = arith.constant 0 : index
    %c0_55 = arith.constant 0 : index
    %c0_56 = arith.constant 0 : index
    %64 = vector.load %arg5[%c0_54, %c0_55, %c0_56] : memref<1x8x2xf32, #tpu.memory_space<vmem>>, vector<1x8x1xf32>
    %65 = vector.shape_cast %64 : vector<1x8x1xf32> to vector<8x1xf32>
    %66 = vector.shape_cast %63 : vector<8x1xf32> to vector<1x8x1xf32>
    tpu.vector_store %arg5[%c0_54, %c0_55, %c0_56], %66 {strides = array<i32>} : memref<1x8x2xf32, #tpu.memory_space<vmem>>, vector<1x8x1xf32>,
    %67 = arith.mulf %57, %57 : vector<8x180xf32>
    %cst_57 = arith.constant dense<0.000000e+00> : vector<8xf32>
    %68 = vector.multi_reduction <add>, %67, %cst_57 [1] : vector<8x180xf32> to vector<8xf32>
    %69 = vector.shape_cast %68 : vector<8xf32> to vector<8x1xf32>
    %c0_58 = arith.constant 0 : index
    %c0_59 = arith.constant 0 : index
    %c1_60 = arith.constant 1 : index
    %70 = vector.load %arg5[%c0_58, %c0_59, %c1_60] : memref<1x8x2xf32, #tpu.memory_space<vmem>>, vector<1x8x1xf32>
    %71 = vector.shape_cast %70 : vector<1x8x1xf32> to vector<8x1xf32>
    %72 = vector.shape_cast %69 : vector<8x1xf32> to vector<1x8x1xf32>
    tpu.vector_store %arg5[%c0_58, %c0_59, %c1_60], %72 {strides = array<i32>} : memref<1x8x2xf32, #tpu.memory_space<vmem>>, vector<1x8x1xf32>,
    return
  }
  func.func @transform_0(%arg0: i32) -> (i32, i32, i32) {
    %c0_i32 = arith.constant 0 : i32
    %c0_i32_0 = arith.constant 0 : i32
    %c0_i32_1 = arith.constant 0 : i32
    return %arg0, %c0_i32, %c0_i32_0 : i32, i32, i32
  }
  func.func @transform_1(%arg0: i32) -> (i32, i32, i32) {
    %c0_i32 = arith.constant 0 : i32
    %c0_i32_0 = arith.constant 0 : i32
    %c0_i32_1 = arith.constant 0 : i32
    %c0_i32_2 = arith.constant 0 : i32
    return %c0_i32, %c0_i32_0, %c0_i32_1 : i32, i32, i32
  }
  func.func @transform_2(%arg0: i32) -> (i32, i32) {
    %c0_i32 = arith.constant 0 : i32
    %c0_i32_0 = arith.constant 0 : i32
    %c0_i32_1 = arith.constant 0 : i32
    return %c0_i32, %c0_i32_0 : i32, i32
  }
  func.func @transform_3(%arg0: i32) -> (i32, i32, i32) {
    %c0_i32 = arith.constant 0 : i32
    %c0_i32_0 = arith.constant 0 : i32
    %c0_i32_1 = arith.constant 0 : i32
    return %arg0, %c0_i32, %c0_i32_0 : i32, i32, i32
  }
  func.func @transform_4(%arg0: i32) -> (i32, i32, i32) {
    %c0_i32 = arith.constant 0 : i32
    %c0_i32_0 = arith.constant 0 : i32
    %c0_i32_1 = arith.constant 0 : i32
    return %arg0, %c0_i32, %c0_i32_0 : i32, i32, i32
  }
}

</mosaic_0001>

<llo_original>
// kernel: tpu_custom_call.1
$region0: #{tpu_custom_call.1}
  #allocation0 [shape = 'u32[]', space=smem, size = 0x4, offset = 0x4, fixed_abs, tag = 'smem constant byte address 0x4 - core index']
  #allocation1 [shape = 'u32[144,128]{1,0:T(1,128)}', space=vmem, size = 0x12000, scoped, tag = 'internal scratch']
  %s0 = inlined_call_operand.hbm [shape: bf16[4,16,222], index: 0, kind: input, shape index: {}]
  %s1 = inlined_call_operand.hbm [shape: bf16[9,8,16], index: 1, kind: input, shape index: {}]
  %s2 = inlined_call_operand.vmem [shape: f32[1,180], index: 2, kind: input, shape index: {}]
  %s3 = inlined_call_operand.hbm [shape: bf16[4,8,180], index: 3, kind: output, shape index: {0}]
  %s4 = inlined_call_operand.vmem [shape: f32[4,8,2], index: 4, kind: output, shape index: {1}]
  %5 = xla_tuple %s3, %s4
  %s6 = sld [smem:[#allocation0]]
  $region61: #{tpu_custom_call.1} parent=0
    _
  %s8 = ssub.s32 1, %s6
  %s9 = scalar_select 0, %s8, %s6
  $region1: #{tpu_custom_call.1} parent=0
    #allocation2 [shape = 'u8[16384]{0}', space=vmem, size = 0x4000, scoped, tag = 'input window, operand 0']
    #allocation3 [shape = 's32[2]{0}', space=sflag, size = 0x8, scoped, tag = 'scoped memory for tpu_custom_call.1']
    #allocation4 [shape = 's32[2]{0}', space=sflag, size = 0x8, scoped, tag = 'scoped memory for tpu_custom_call.1']
    #allocation5 [shape = 'u8[18432]{0}', space=vmem, size = 0x4800, scoped, tag = 'input window, operand 1, single buffered']
    #allocation6 [shape = 's32[1]{0}', space=sflag, size = 0x4, scoped, tag = 'scoped memory for tpu_custom_call.1']
    #allocation7 [shape = 'u8[8192]{0}', space=vmem, size = 0x2000, scoped, tag = 'output window, operand 0']
    %10 = vsyncpa [#allocation3], 0
    %s11 = scalar_lea.sflag [#allocation3], 1
    %12 = vsyncpa %s11, 0
    %13 = vsyncpa [#allocation6], 0
    %14 = vsyncpa [#allocation4], 0
    %s15 = scalar_lea.sflag [#allocation4], 1
    %16 = vsyncpa %s15, 0
    loop: start=0, step=1, limit=6
    $region2: #{tpu_custom_call.1} parent=1 // loop_pre_header
      _
    $region3: #{tpu_custom_call.1} parent=1 // loop_header
      %s18 = sphi 0, %s22
      %p19 = scmp.ge.s32.totalorder %s18, 6
      %s28 = sphi 0, %s30
      %s31 = sphi 0, %s28
      %s32 = sphi 0, %s31
      %s48 = sphi 0, %s32
      %s52 = sphi 0, %s52
      %s54 = sphi 0, %s52
      %s55 = sphi 0, %s54
      %s69 = sphi 0, %s55
      %s73 = sphi 0, %s73
      %s75 = sphi 0, %s73
      %s76 = sphi 0, %s75
      %s90 = sphi 0, %s76
      %s96 = sphi 0, %s98
      %s99 = sphi 0, %s96
      %s100 = sphi 0, %s99
      %s116 = sphi 0, %s100
      %s122 = sphi 0, %s124
      %s125 = sphi 0, %s122
      %s126 = sphi 0, %s125
      %s142 = sphi 0, %s126
    $region4: #{tpu_custom_call.1} parent=1 // loop_header_branch
      %21 = sbr.rel (%p19) target = $region8
    $region5: #{tpu_custom_call.1} parent=1 // loop_body
      %s23 = ssub.s32 %s18, 1
      %s24 = ssub.s32 %s18, 2
      %s25 = sadd.s32 %s18, 1
      %s26 = ssub.s32 %s18, %s25
      %p27 = scmp.eq.s32.totalorder %s26, 0
      %s29 = sadd.s32 %s28, 1
      %s30 = scalar_select %p27, %s28, %s29
      %p33 = pneg %p27
      %p34 = scmp.eq.s32.totalorder %s18, 3
      %p35 = por %p33, %p34
      %p36 = scmp.ne.s32.totalorder %s28, %s31
      %p37 = scmp.eq.s32.totalorder %s18, 0
      %p38 = por %p36, %p37
      %p39 = scmp.ne.s32.totalorder %s28, %s31
      %p40 = scmp.eq.s32.totalorder %s23, 3
      %p41 = por %p39, %p40
      %p42 = scmp.ne.s32.totalorder %s31, %s32
      %p43 = scmp.eq.s32.totalorder %s23, 0
      %p44 = por %p42, %p43
      %p45 = scmp.ne.s32.totalorder %s31, %s32
      %p46 = scmp.eq.s32.totalorder %s24, 3
      %p47 = por %p45, %p46
      %p49 = scmp.ne.s32.totalorder %s32, %s48
      %p50 = scmp.eq.s32.totalorder %s24, 0
      %p51 = por %p49, %p50
      %s53 = sadd.s32 %s52, 1
      %p56 = scmp.eq.s32.totalorder %s18, 3
      %p57 = scmp.ne.s32.totalorder %s52, %s54
      %p58 = scmp.eq.s32.totalorder %s18, 0
      %p59 = por %p57, %p58
      %p60 = scmp.ne.s32.totalorder %s52, %s54
      %p61 = scmp.eq.s32.totalorder %s23, 3
      %p62 = por %p60, %p61
      %p63 = scmp.ne.s32.totalorder %s54, %s55
      %p64 = scmp.eq.s32.totalorder %s23, 0
      %p65 = por %p63, %p64
      %p66 = scmp.ne.s32.totalorder %s54, %s55
      %p67 = scmp.eq.s32.totalorder %s24, 3
      %p68 = por %p66, %p67
      %p70 = scmp.ne.s32.totalorder %s55, %s69
      %p71 = scmp.eq.s32.totalorder %s24, 0
      %p72 = por %p70, %p71
      %s74 = sadd.s32 %s73, 1
      %p77 = scmp.eq.s32.totalorder %s18, 3
      %p78 = scmp.ne.s32.totalorder %s73, %s75
      %p79 = scmp.eq.s32.totalorder %s18, 0
      %p80 = por %p78, %p79
      %p81 = scmp.ne.s32.totalorder %s73, %s75
      %p82 = scmp.eq.s32.totalorder %s23, 3
      %p83 = por %p81, %p82
      %p84 = scmp.ne.s32.totalorder %s75, %s76
      %p85 = scmp.eq.s32.totalorder %s23, 0
      %p86 = por %p84, %p85
      %p87 = scmp.ne.s32.totalorder %s75, %s76
      %p88 = scmp.eq.s32.totalorder %s24, 3
      %p89 = por %p87, %p88
      %p91 = scmp.ne.s32.totalorder %s76, %s90
      %p92 = scmp.eq.s32.totalorder %s24, 0
      %p93 = por %p91, %p92
      %s94 = ssub.s32 %s18, %s25
      %p95 = scmp.eq.s32.totalorder %s94, 0
      %s97 = sadd.s32 %s96, 1
      %s98 = scalar_select %p95, %s96, %s97
      %p101 = pneg %p95
      %p102 = scmp.eq.s32.totalorder %s18, 3
      %p103 = por %p101, %p102
      %p104 = scmp.ne.s32.totalorder %s96, %s99
      %p105 = scmp.eq.s32.totalorder %s18, 0
      %p106 = por %p104, %p105
      %p107 = scmp.ne.s32.totalorder %s96, %s99
      %p108 = scmp.eq.s32.totalorder %s23, 3
      %p109 = por %p107, %p108
      %p110 = scmp.ne.s32.totalorder %s99, %s100
      %p111 = scmp.eq.s32.totalorder %s23, 0
      %p112 = por %p110, %p111
      %p113 = scmp.ne.s32.totalorder %s99, %s100
      %p114 = scmp.eq.s32.totalorder %s24, 3
      %p115 = por %p113, %p114
      %p117 = scmp.ne.s32.totalorder %s100, %s116
      %p118 = scmp.eq.s32.totalorder %s24, 0
      %p119 = por %p117, %p118
      %s120 = ssub.s32 %s18, %s25
      %p121 = scmp.eq.s32.totalorder %s120, 0
      %s123 = sadd.s32 %s122, 1
      %s124 = scalar_select %p121, %s122, %s123
      %p127 = pneg %p121
      %p128 = scmp.eq.s32.totalorder %s18, 3
      %p129 = por %p127, %p128
      %p130 = scmp.ne.s32.totalorder %s122, %s125
      %p131 = scmp.eq.s32.totalorder %s18, 0
      %p132 = por %p130, %p131
      %p133 = scmp.ne.s32.totalorder %s122, %s125
      %p134 = scmp.eq.s32.totalorder %s23, 3
      %p135 = por %p133, %p134
      %p136 = scmp.ne.s32.totalorder %s125, %s126
      %p137 = scmp.eq.s32.totalorder %s23, 0
      %p138 = por %p136, %p137
      %p139 = scmp.ne.s32.totalorder %s125, %s126
      %p140 = scmp.eq.s32.totalorder %s24, 3
      %p141 = por %p139, %p140
      %p143 = scmp.ne.s32.totalorder %s126, %s142
      %p144 = scmp.eq.s32.totalorder %s24, 0
      %p145 = por %p143, %p144
      %p146 = scmp.le.s32.totalorder 1, %s18
      %p147 = scmp.lt.s32.totalorder %s18, 5
      %p148 = pnand %p146, %p147
      %p149 = pneg %p148
      // Predicated region
      $region9: #{tpu_custom_call.1} parent=5 // pred_check
        _
      $region10: #{tpu_custom_call.1} parent=5 // pred_check_branch
        %151 = sbr.rel (%p148) target = $region12
      $region11: #{tpu_custom_call.1} parent=5 // pred_region
        %s152 = ssub.s32 %s18, 1
        // Predicated region
        $region13: #{tpu_custom_call.1} parent=11 // pred_check
          %p153 = pneg %p65
        $region14: #{tpu_custom_call.1} parent=11 // pred_check_branch
          %155 = sbr.rel (%p153) target = $region16
        $region15: #{tpu_custom_call.1} parent=11 // pred_region
          %s157 = ssub.s32 576, 576
          %158 = vsyncadd [#allocation6], %s157
          %s159 = sshll.u32 [#allocation5], 4
          %s160 = int_to_ptr.vmem [resolvable:$true] %s159
          %165 = dma.hbm_to_vmem [thread:$0]  %s1, 576, %s160, [#allocation6], 64, 64, 4
        $region16: #{tpu_custom_call.1} parent=11 // pred_fallthru
          _
        // Predicated region
        $region17: #{tpu_custom_call.1} parent=11 // pred_check
          %p166 = pneg %p86
        $region18: #{tpu_custom_call.1} parent=11 // pred_check_branch
          %168 = sbr.rel (%p166) target = $region20
        $region19: #{tpu_custom_call.1} parent=11 // pred_region
          _
        $region20: #{tpu_custom_call.1} parent=11 // pred_fallthru
          _
      $region12: #{tpu_custom_call.1} parent=5 // pred_fallthru
        _
      %p169 = scmp.lt.s32.totalorder %s18, 4
      // Predicated region
      $region21: #{tpu_custom_call.1} parent=5 // pred_check
        %p170 = pneg %p169
      $region22: #{tpu_custom_call.1} parent=5 // pred_check_branch
        %172 = sbr.rel (%p170) target = $region24
      $region23: #{tpu_custom_call.1} parent=5 // pred_region
        // Predicated region
        $region25: #{tpu_custom_call.1} parent=23 // pred_check
          %p173 = pneg %p38
        $region26: #{tpu_custom_call.1} parent=23 // pred_check_branch
          %175 = sbr.rel (%p173) target = $region28
        $region27: #{tpu_custom_call.1} parent=23 // pred_region
          %s176 = sand.u32 %s28, 1
          %s177 = scalar_lea.sflag [#allocation3], %s176
          %s178 = sand.u32 %s28, 1
          %s179 = smul.addr %s178, 16
          %s180 = scalar_lea.vmem [#allocation2], %s179
          %s182 = ssub.s32 256, 256
          %183 = vsyncadd %s177, %s182
          %s184 = smul.addr %s18, 4
          %s185 = smul.addr %s184, 64
          %s186 = scalar_lea.hbm %s0, %s185
          %s187 = sshll.u32 %s180, 4
          %s188 = int_to_ptr.vmem [resolvable:$true] %s187
          %193 = dma.hbm_to_vmem [thread:$0]  %s186, 256, %s188, %s177, 128, 128, 8
        $region28: #{tpu_custom_call.1} parent=23 // pred_fallthru
          _
      $region24: #{tpu_custom_call.1} parent=5 // pred_fallthru
        _
      %p194 = scmp.le.s32.totalorder 1, %s18
      %p195 = scmp.lt.s32.totalorder %s18, 5
      %p196 = pnand %p194, %p195
      %p197 = pneg %p196
      // Predicated region
      $region29: #{tpu_custom_call.1} parent=5 // pred_check
        _
      $region30: #{tpu_custom_call.1} parent=5 // pred_check_branch
        %199 = sbr.rel (%p196) target = $region32
      $region31: #{tpu_custom_call.1} parent=5 // pred_region
        %s200 = ssub.s32 %s18, 1
        %s201 = sand.u32 %s31, 1
        %s202 = scalar_lea.sflag [#allocation3], %s201
        %s203 = sand.u32 %s31, 1
        %s204 = smul.addr %s203, 16
        %s205 = scalar_lea.vmem [#allocation2], %s204
        // Predicated region
        $region33: #{tpu_custom_call.1} parent=31 // pred_check
          %p206 = pneg %p44
        $region34: #{tpu_custom_call.1} parent=31 // pred_check_branch
          %208 = sbr.rel (%p206) target = $region36
        $region35: #{tpu_custom_call.1} parent=31 // pred_region
          %209 = dma.done %s202, 256
        $region36: #{tpu_custom_call.1} parent=31 // pred_fallthru
          _
        // Predicated region
        $region37: #{tpu_custom_call.1} parent=31 // pred_check
          %p210 = pneg %p65
        $region38: #{tpu_custom_call.1} parent=31 // pred_check_branch
          %212 = sbr.rel (%p210) target = $region40
        $region39: #{tpu_custom_call.1} parent=31 // pred_region
          %213 = dma.done [#allocation6], 576
        $region40: #{tpu_custom_call.1} parent=31 // pred_fallthru
          _
        %s214 = sand.u32 %s31, 1
        %s215 = scalar_lea.sflag [#allocation3], %s214
        %s216 = sand.u32 %s31, 1
        %s217 = smul.addr %s216, 16
        %s218 = scalar_lea.vmem [#allocation2], %s217
        %p219 = pneg %p44
        %p220 = pneg %p41
        %p221 = pneg %p65
        %p222 = pneg %p62
        %p223 = pneg %p86
        %p224 = pneg %p83
        %p225 = pneg %p112
        %p226 = pneg %p109
        %s227 = sand.u32 %s99, 1
        %s228 = scalar_lea.sflag [#allocation4], %s227
        %s229 = sand.u32 %s99, 1
        %s230 = smul.addr %s229, 8
        %s231 = scalar_lea.vmem [#allocation7], %s230
        %p232 = pneg %p138
        %p233 = pneg %p135
        %p234 = scmp.lt.s32.totalorder %s23, 3
        %s235 = scalar_select %p234, %s23, 3
        %s236 = smul.addr %s235, 8
        %s237 = scalar_lea.vmem %s4, %s236
        %p238 = scmp.lt.s32.totalorder %s23, 3
        %s239 = scalar_select %p238, %s23, 3
        %s240 = smul.addr %s239, 8
        %s241 = scalar_lea.vmem %s4, %s240
        %v243 = vld [vmem:[#allocation5] sm:$0xf]
        %v244 = vld [vmem:[%s205] sm:$0xff]
        %v245 = vld [vmem:[%s205 + $0x8] sm:$0xff]
        %s246 = scalar_lea.vmem [#allocation5], 4
        %v247 = vld [vmem:[%s246] sm:$0xf]
        %v250 = vunpack.c.l.b16 %v244
        %v251 = vunpack.c.h.b16 %v244
        %v252 = vunpack.c.l.b16 %v245
        %v253 = vunpack.c.h.b16 %v245
        %v254 = vpack.c.b16 %v252, %v250
        %v255 = vpack.c.b16 %v253, %v251
        %256 = vrot.lane.b32.xlu0 %v254, 127
        %v257 = vpop.permute.xlu0 %256
        %258 = vrot.lane.b32.xlu0 %v255, 127
        %v259 = vpop.permute.xlu0 %258
        %vm260 = vcmask 1039360
        %v261 = vsel %vm260, %v257, %v259
        %vm264 = vcmask 130048
        %v266 = vsel %vm264, %v247, 0
        %268 = vmatprep.subr.bf16.mxu0 %v259
        %269 = vmatpush1.bf16.msra.mxu0 %v261
        %270 = vmatprep.subr.bf16.mxu0 0
        %271 = vmatpush1.bf16.msra.mxu0 0
        %272 = vmatprep.subr.bf16.mxu0 0
        %273 = vmatpush1.bf16.msra.mxu0 0
        %274 = vmatprep.subr.bf16.mxu0 0
        %275 = vmatpush1.bf16.msra.mxu0 0
        %276 = vmatprep.subr.bf16.mxu0 0
        %277 = vmatpush1.bf16.msra.mxu0 0
        %278 = vmatprep.subr.bf16.mxu0 0
        %279 = vmatpush1.bf16.msra.mxu0 0
        %280 = vmatprep.subr.bf16.mxu0 0
        %281 = vmatpush1.bf16.msra.mxu0 0
        %282 = vmatprep.subr.bf16.mxu0 0
        %283 = vmatpush1.bf16.msra.mxu0 0
        %284 = vmatprep.subr.bf16.mxu0 0
        %285 = vmatpush1.bf16.msra.mxu0 0
        %286 = vmatprep.subr.bf16.mxu0 0
        %287 = vmatpush1.bf16.msra.mxu0 0
        %288 = vmatprep.subr.bf16.mxu0 0
        %289 = vmatpush1.bf16.msra.mxu0 0
        %290 = vmatprep.subr.bf16.mxu0 0
        %291 = vmatpush1.bf16.msra.mxu0 0
        %292 = vmatprep.subr.bf16.mxu0 0
        %293 = vmatpush1.bf16.msra.mxu0 0
        %294 = vmatprep.subr.bf16.mxu0 0
        %295 = vmatpush1.bf16.msra.mxu0 0
        %296 = vmatprep.subr.bf16.mxu0 0
        %297 = vmatpush1.bf16.msra.mxu0 0
        %298 = vmatprep.subr.bf16.mxu0 0
        %299 = vmatpush1.bf16.msra.mxu0 0
        %300 = vmatprep.mubr.bf16.mxu0 0
        %301 = vmatmul.mubr.bf16.gmra.mrb[0].mxu0 %v266
        %v302 = vpop.f32.mrb[0].mxu0
        %v303 = vadd.f32 0.0, %v302
        %v304 = vpop.f32.mrb[0].mxu0
        %v305 = vadd.f32 0.0, %v304
        %v306 = vpop.f32.mrb[0].mxu0
        %v307 = vpop.f32.mrb[0].mxu0
        %308 = vdwg.mxu0
        %v312 = vsel %vm264, %v243, 0
        %314 = vmatprep.subr.bf16.mxu0 %v255
        %315 = vmatpush1.bf16.msra.mxu0 %v254
        %316 = vmatprep.subr.bf16.mxu0 0
        %317 = vmatpush1.bf16.msra.mxu0 0
        %318 = vmatprep.subr.bf16.mxu0 0
        %319 = vmatpush1.bf16.msra.mxu0 0
        %320 = vmatprep.subr.bf16.mxu0 0
        %321 = vmatpush1.bf16.msra.mxu0 0
        %322 = vmatprep.subr.bf16.mxu0 0
        %323 = vmatpush1.bf16.msra.mxu0 0
        %324 = vmatprep.subr.bf16.mxu0 0
        %325 = vmatpush1.bf16.msra.mxu0 0
        %326 = vmatprep.subr.bf16.mxu0 0
        %327 = vmatpush1.bf16.msra.mxu0 0
        %328 = vmatprep.subr.bf16.mxu0 0
        %329 = vmatpush1.bf16.msra.mxu0 0
        %330 = vmatprep.subr.bf16.mxu0 0
        %331 = vmatpush1.bf16.msra.mxu0 0
        %332 = vmatprep.subr.bf16.mxu0 0
        %333 = vmatpush1.bf16.msra.mxu0 0
        %334 = vmatprep.subr.bf16.mxu0 0
        %335 = vmatpush1.bf16.msra.mxu0 0
        %336 = vmatprep.subr.bf16.mxu0 0
        %337 = vmatpush1.bf16.msra.mxu0 0
        %338 = vmatprep.subr.bf16.mxu0 0
        %339 = vmatpush1.bf16.msra.mxu0 0
        %340 = vmatprep.subr.bf16.mxu0 0
        %341 = vmatpush1.bf16.msra.mxu0 0
        %342 = vmatprep.subr.bf16.mxu0 0
        %343 = vmatpush1.bf16.msra.mxu0 0
        %344 = vmatprep.subr.bf16.mxu0 0
        %345 = vmatpush1.bf16.msra.mxu0 0
        %346 = vmatprep.mubr.bf16.mxu0 0
        %347 = vmatmul.mubr.bf16.gmra.mrb[0].mxu0 %v312
        %v348 = vpop.f32.mrb[0].mxu0
        %v349 = vadd.f32 %v303, %v348
        %v350 = vpop.f32.mrb[0].mxu0
        %v351 = vadd.f32 %v305, %v350
        %v352 = vpop.f32.mrb[0].mxu0
        %v353 = vpop.f32.mrb[0].mxu0
        %354 = vdwg.mxu0
        %s355 = scalar_lea.vmem [#allocation5], 8
        %v356 = vld [vmem:[%s355] sm:$0xf]
        %357 = vrot.lane.b32.xlu0 %v254, 126
        %v358 = vpop.permute.xlu0 %357
        %359 = vrot.lane.b32.xlu0 %v255, 126
        %v360 = vpop.permute.xlu0 %359
        %vm361 = vcmask 1031168
        %v362 = vsel %vm361, %v358, %v360
        %v366 = vsel %vm264, %v356, 0
        %368 = vmatprep.subr.bf16.mxu0 %v360
        %369 = vmatpush1.bf16.msra.mxu0 %v362
        %370 = vmatprep.subr.bf16.mxu0 0
        %371 = vmatpush1.bf16.msra.mxu0 0
        %372 = vmatprep.subr.bf16.mxu0 0
        %373 = vmatpush1.bf16.msra.mxu0 0
        %374 = vmatprep.subr.bf16.mxu0 0
        %375 = vmatpush1.bf16.msra.mxu0 0
        %376 = vmatprep.subr.bf16.mxu0 0
        %377 = vmatpush1.bf16.msra.mxu0 0
        %378 = vmatprep.subr.bf16.mxu0 0
        %379 = vmatpush1.bf16.msra.mxu0 0
        %380 = vmatprep.subr.bf16.mxu0 0
        %381 = vmatpush1.bf16.msra.mxu0 0
        %382 = vmatprep.subr.bf16.mxu0 0
        %383 = vmatpush1.bf16.msra.mxu0 0
        %384 = vmatprep.subr.bf16.mxu0 0
        %385 = vmatpush1.bf16.msra.mxu0 0
        %386 = vmatprep.subr.bf16.mxu0 0
        %387 = vmatpush1.bf16.msra.mxu0 0
        %388 = vmatprep.subr.bf16.mxu0 0
        %389 = vmatpush1.bf16.msra.mxu0 0
        %390 = vmatprep.subr.bf16.mxu0 0
        %391 = vmatpush1.bf16.msra.mxu0 0
        %392 = vmatprep.subr.bf16.mxu0 0
        %393 = vmatpush1.bf16.msra.mxu0 0
        %394 = vmatprep.subr.bf16.mxu0 0
        %395 = vmatpush1.bf16.msra.mxu0 0
        %396 = vmatprep.subr.bf16.mxu0 0
        %397 = vmatpush1.bf16.msra.mxu0 0
        %398 = vmatprep.subr.bf16.mxu0 0
        %399 = vmatpush1.bf16.msra.mxu0 0
        %400 = vmatprep.mubr.bf16.mxu0 0
        %401 = vmatmul.mubr.bf16.gmra.mrb[0].mxu0 %v366
        %v402 = vpop.f32.mrb[0].mxu0
        %v403 = vadd.f32 0.0, %v402
        %v404 = vpop.f32.mrb[0].mxu0
        %v405 = vadd.f32 0.0, %v404
        %v406 = vpop.f32.mrb[0].mxu0
        %v407 = vpop.f32.mrb[0].mxu0
        %408 = vdwg.mxu0
        %v409 = vadd.f32 %v349, %v403
        %v410 = vadd.f32 %v351, %v405
        %s411 = scalar_lea.vmem [#allocation5], 12
        %v412 = vld [vmem:[%s411] sm:$0xf]
        %413 = vrot.lane.b32.xlu0 %v254, 108
        %v414 = vpop.permute.xlu0 %413
        %415 = vrot.lane.b32.xlu0 %v255, 108
        %v416 = vpop.permute.xlu0 %415
        %vm417 = vcmask 883712
        %v418 = vsel %vm417, %v414, %v416
        %v422 = vsel %vm264, %v412, 0
        %424 = vmatprep.subr.bf16.mxu0 %v416
        %425 = vmatpush1.bf16.msra.mxu0 %v418
        %426 = vmatprep.subr.bf16.mxu0 0
        %427 = vmatpush1.bf16.msra.mxu0 0
        %428 = vmatprep.subr.bf16.mxu0 0
        %429 = vmatpush1.bf16.msra.mxu0 0
        %430 = vmatprep.subr.bf16.mxu0 0
        %431 = vmatpush1.bf16.msra.mxu0 0
        %432 = vmatprep.subr.bf16.mxu0 0
        %433 = vmatpush1.bf16.msra.mxu0 0
        %434 = vmatprep.subr.bf16.mxu0 0
        %435 = vmatpush1.bf16.msra.mxu0 0
        %436 = vmatprep.subr.bf16.mxu0 0
        %437 = vmatpush1.bf16.msra.mxu0 0
        %438 = vmatprep.subr.bf16.mxu0 0
        %439 = vmatpush1.bf16.msra.mxu0 0
        %440 = vmatprep.subr.bf16.mxu0 0
        %441 = vmatpush1.bf16.msra.mxu0 0
        %442 = vmatprep.subr.bf16.mxu0 0
        %443 = vmatpush1.bf16.msra.mxu0 0
        %444 = vmatprep.subr.bf16.mxu0 0
        %445 = vmatpush1.bf16.msra.mxu0 0
        %446 = vmatprep.subr.bf16.mxu0 0
        %447 = vmatpush1.bf16.msra.mxu0 0
        %448 = vmatprep.subr.bf16.mxu0 0
        %449 = vmatpush1.bf16.msra.mxu0 0
        %450 = vmatprep.subr.bf16.mxu0 0
        %451 = vmatpush1.bf16.msra.mxu0 0
        %452 = vmatprep.subr.bf16.mxu0 0
        %453 = vmatpush1.bf16.msra.mxu0 0
        %454 = vmatprep.subr.bf16.mxu0 0
        %455 = vmatpush1.bf16.msra.mxu0 0
        %456 = vmatprep.mubr.bf16.mxu0 0
        %457 = vmatmul.mubr.bf16.gmra.mrb[0].mxu0 %v422
        %v458 = vpop.f32.mrb[0].mxu0
        %v459 = vadd.f32 0.0, %v458
        %v460 = vpop.f32.mrb[0].mxu0
        %v461 = vadd.f32 0.0, %v460
        %v462 = vpop.f32.mrb[0].mxu0
        %v463 = vpop.f32.mrb[0].mxu0
        %464 = vdwg.mxu0
        %v465 = vadd.f32 %v409, %v459
        %v466 = vadd.f32 %v410, %v461
        %s467 = scalar_lea.vmem [#allocation5], 16
        %v468 = vld [vmem:[%s467] sm:$0xf]
        %469 = vrot.lane.b32.xlu0 %v254, 107
        %v470 = vpop.permute.xlu0 %469
        %471 = vrot.lane.b32.xlu0 %v255, 107
        %v472 = vpop.permute.xlu0 %471
        %vm473 = vcmask 875520
        %v474 = vsel %vm473, %v470, %v472
        %v478 = vsel %vm264, %v468, 0
        %480 = vmatprep.subr.bf16.mxu0 %v472
        %481 = vmatpush1.bf16.msra.mxu0 %v474
        %482 = vmatprep.subr.bf16.mxu0 0
        %483 = vmatpush1.bf16.msra.mxu0 0
        %484 = vmatprep.subr.bf16.mxu0 0
        %485 = vmatpush1.bf16.msra.mxu0 0
        %486 = vmatprep.subr.bf16.mxu0 0
        %487 = vmatpush1.bf16.msra.mxu0 0
        %488 = vmatprep.subr.bf16.mxu0 0
        %489 = vmatpush1.bf16.msra.mxu0 0
        %490 = vmatprep.subr.bf16.mxu0 0
        %491 = vmatpush1.bf16.msra.mxu0 0
        %492 = vmatprep.subr.bf16.mxu0 0
        %493 = vmatpush1.bf16.msra.mxu0 0
        %494 = vmatprep.subr.bf16.mxu0 0
        %495 = vmatpush1.bf16.msra.mxu0 0
        %496 = vmatprep.subr.bf16.mxu0 0
        %497 = vmatpush1.bf16.msra.mxu0 0
        %498 = vmatprep.subr.bf16.mxu0 0
        %499 = vmatpush1.bf16.msra.mxu0 0
        %500 = vmatprep.subr.bf16.mxu0 0
        %501 = vmatpush1.bf16.msra.mxu0 0
        %502 = vmatprep.subr.bf16.mxu0 0
        %503 = vmatpush1.bf16.msra.mxu0 0
        %504 = vmatprep.subr.bf16.mxu0 0
        %505 = vmatpush1.bf16.msra.mxu0 0
        %506 = vmatprep.subr.bf16.mxu0 0
        %507 = vmatpush1.bf16.msra.mxu0 0
        %508 = vmatprep.subr.bf16.mxu0 0
        %509 = vmatpush1.bf16.msra.mxu0 0
        %510 = vmatprep.subr.bf16.mxu0 0
        %511 = vmatpush1.bf16.msra.mxu0 0
        %512 = vmatprep.mubr.bf16.mxu0 0
        %513 = vmatmul.mubr.bf16.gmra.mrb[0].mxu0 %v478
        %v514 = vpop.f32.mrb[0].mxu0
        %v515 = vadd.f32 0.0, %v514
        %v516 = vpop.f32.mrb[0].mxu0
        %v517 = vadd.f32 0.0, %v516
        %v518 = vpop.f32.mrb[0].mxu0
        %v519 = vpop.f32.mrb[0].mxu0
        %520 = vdwg.mxu0
        %v521 = vadd.f32 %v465, %v515
        %v522 = vadd.f32 %v466, %v517
        %s523 = scalar_lea.vmem [#allocation5], 20
        %v524 = vld [vmem:[%s523] sm:$0xf]
        %525 = vrot.lane.b32.xlu0 %v254, 106
        %v526 = vpop.permute.xlu0 %525
        %527 = vrot.lane.b32.xlu0 %v255, 106
        %v528 = vpop.permute.xlu0 %527
        %vm529 = vcmask 867328
        %v530 = vsel %vm529, %v526, %v528
        %v534 = vsel %vm264, %v524, 0
        %536 = vmatprep.subr.bf16.mxu0 %v528
        %537 = vmatpush1.bf16.msra.mxu0 %v530
        %538 = vmatprep.subr.bf16.mxu0 0
        %539 = vmatpush1.bf16.msra.mxu0 0
        %540 = vmatprep.subr.bf16.mxu0 0
        %541 = vmatpush1.bf16.msra.mxu0 0
        %542 = vmatprep.subr.bf16.mxu0 0
        %543 = vmatpush1.bf16.msra.mxu0 0
        %544 = vmatprep.subr.bf16.mxu0 0
        %545 = vmatpush1.bf16.msra.mxu0 0
        %546 = vmatprep.subr.bf16.mxu0 0
        %547 = vmatpush1.bf16.msra.mxu0 0
        %548 = vmatprep.subr.bf16.mxu0 0
        %549 = vmatpush1.bf16.msra.mxu0 0
        %550 = vmatprep.subr.bf16.mxu0 0
        %551 = vmatpush1.bf16.msra.mxu0 0
        %552 = vmatprep.subr.bf16.mxu0 0
        %553 = vmatpush1.bf16.msra.mxu0 0
        %554 = vmatprep.subr.bf16.mxu0 0
        %555 = vmatpush1.bf16.msra.mxu0 0
        %556 = vmatprep.subr.bf16.mxu0 0
        %557 = vmatpush1.bf16.msra.mxu0 0
        %558 = vmatprep.subr.bf16.mxu0 0
        %559 = vmatpush1.bf16.msra.mxu0 0
        %560 = vmatprep.subr.bf16.mxu0 0
        %561 = vmatpush1.bf16.msra.mxu0 0
        %562 = vmatprep.subr.bf16.mxu0 0
        %563 = vmatpush1.bf16.msra.mxu0 0
        %564 = vmatprep.subr.bf16.mxu0 0
        %565 = vmatpush1.bf16.msra.mxu0 0
        %566 = vmatprep.subr.bf16.mxu0 0
        %567 = vmatpush1.bf16.msra.mxu0 0
        %568 = vmatprep.mubr.bf16.mxu0 0
        %569 = vmatmul.mubr.bf16.gmra.mrb[0].mxu0 %v534
        %v570 = vpop.f32.mrb[0].mxu0
        %v571 = vadd.f32 0.0, %v570
        %v572 = vpop.f32.mrb[0].mxu0
        %v573 = vadd.f32 0.0, %v572
        %v574 = vpop.f32.mrb[0].mxu0
        %v575 = vpop.f32.mrb[0].mxu0
        %576 = vdwg.mxu0
        %v577 = vadd.f32 %v521, %v571
        %v578 = vadd.f32 %v522, %v573
        %s579 = scalar_lea.vmem [#allocation5], 24
        %v580 = vld [vmem:[%s579] sm:$0xf]
        %581 = vrot.lane.b32.xlu0 %v254, 88
        %v582 = vpop.permute.xlu0 %581
        %583 = vrot.lane.b32.xlu0 %v255, 88
        %v584 = vpop.permute.xlu0 %583
        %vm585 = vcmask 719872
        %v586 = vsel %vm585, %v582, %v584
        %v590 = vsel %vm264, %v580, 0
        %592 = vmatprep.subr.bf16.mxu0 %v584
        %593 = vmatpush1.bf16.msra.mxu0 %v586
        %594 = vmatprep.subr.bf16.mxu0 0
        %595 = vmatpush1.bf16.msra.mxu0 0
        %596 = vmatprep.subr.bf16.mxu0 0
        %597 = vmatpush1.bf16.msra.mxu0 0
        %598 = vmatprep.subr.bf16.mxu0 0
        %599 = vmatpush1.bf16.msra.mxu0 0
        %600 = vmatprep.subr.bf16.mxu0 0
        %601 = vmatpush1.bf16.msra.mxu0 0
        %602 = vmatprep.subr.bf16.mxu0 0
        %603 = vmatpush1.bf16.msra.mxu0 0
        %604 = vmatprep.subr.bf16.mxu0 0
        %605 = vmatpush1.bf16.msra.mxu0 0
        %606 = vmatprep.subr.bf16.mxu0 0
        %607 = vmatpush1.bf16.msra.mxu0 0
        %608 = vmatprep.subr.bf16.mxu0 0
        %609 = vmatpush1.bf16.msra.mxu0 0
        %610 = vmatprep.subr.bf16.mxu0 0
        %611 = vmatpush1.bf16.msra.mxu0 0
        %612 = vmatprep.subr.bf16.mxu0 0
        %613 = vmatpush1.bf16.msra.mxu0 0
        %614 = vmatprep.subr.bf16.mxu0 0
        %615 = vmatpush1.bf16.msra.mxu0 0
        %616 = vmatprep.subr.bf16.mxu0 0
        %617 = vmatpush1.bf16.msra.mxu0 0
        %618 = vmatprep.subr.bf16.mxu0 0
        %619 = vmatpush1.bf16.msra.mxu0 0
        %620 = vmatprep.subr.bf16.mxu0 0
        %621 = vmatpush1.bf16.msra.mxu0 0
        %622 = vmatprep.subr.bf16.mxu0 0
        %623 = vmatpush1.bf16.msra.mxu0 0
        %624 = vmatprep.mubr.bf16.mxu0 0
        %625 = vmatmul.mubr.bf16.gmra.mrb[0].mxu0 %v590
        %v626 = vpop.f32.mrb[0].mxu0
        %v627 = vadd.f32 0.0, %v626
        %v628 = vpop.f32.mrb[0].mxu0
        %v629 = vadd.f32 0.0, %v628
        %v630 = vpop.f32.mrb[0].mxu0
        %v631 = vpop.f32.mrb[0].mxu0
        %632 = vdwg.mxu0
        %v633 = vadd.f32 %v577, %v627
        %v634 = vadd.f32 %v578, %v629
        %s635 = scalar_lea.vmem [#allocation5], 28
        %v636 = vld [vmem:[%s635] sm:$0xf]
        %637 = vrot.lane.b32.xlu0 %v254, 87
        %v638 = vpop.permute.xlu0 %637
        %639 = vrot.lane.b32.xlu0 %v255, 87
        %v640 = vpop.permute.xlu0 %639
        %vm641 = vcmask 711680
        %v642 = vsel %vm641, %v638, %v640
        %v646 = vsel %vm264, %v636, 0
        %648 = vmatprep.subr.bf16.mxu0 %v640
        %649 = vmatpush1.bf16.msra.mxu0 %v642
        %650 = vmatprep.subr.bf16.mxu0 0
        %651 = vmatpush1.bf16.msra.mxu0 0
        %652 = vmatprep.subr.bf16.mxu0 0
        %653 = vmatpush1.bf16.msra.mxu0 0
        %654 = vmatprep.subr.bf16.mxu0 0
        %655 = vmatpush1.bf16.msra.mxu0 0
        %656 = vmatprep.subr.bf16.mxu0 0
        %657 = vmatpush1.bf16.msra.mxu0 0
        %658 = vmatprep.subr.bf16.mxu0 0
        %659 = vmatpush1.bf16.msra.mxu0 0
        %660 = vmatprep.subr.bf16.mxu0 0
        %661 = vmatpush1.bf16.msra.mxu0 0
        %662 = vmatprep.subr.bf16.mxu0 0
        %663 = vmatpush1.bf16.msra.mxu0 0
        %664 = vmatprep.subr.bf16.mxu0 0
        %665 = vmatpush1.bf16.msra.mxu0 0
        %666 = vmatprep.subr.bf16.mxu0 0
        %667 = vmatpush1.bf16.msra.mxu0 0
        %668 = vmatprep.subr.bf16.mxu0 0
        %669 = vmatpush1.bf16.msra.mxu0 0
        %670 = vmatprep.subr.bf16.mxu0 0
        %671 = vmatpush1.bf16.msra.mxu0 0
        %672 = vmatprep.subr.bf16.mxu0 0
        %673 = vmatpush1.bf16.msra.mxu0 0
        %674 = vmatprep.subr.bf16.mxu0 0
        %675 = vmatpush1.bf16.msra.mxu0 0
        %676 = vmatprep.subr.bf16.mxu0 0
        %677 = vmatpush1.bf16.msra.mxu0 0
        %678 = vmatprep.subr.bf16.mxu0 0
        %679 = vmatpush1.bf16.msra.mxu0 0
        %680 = vmatprep.mubr.bf16.mxu0 0
        %681 = vmatmul.mubr.bf16.gmra.mrb[0].mxu0 %v646
        %v682 = vpop.f32.mrb[0].mxu0
        %v683 = vadd.f32 0.0, %v682
        %v684 = vpop.f32.mrb[0].mxu0
        %v685 = vadd.f32 0.0, %v684
        %v686 = vpop.f32.mrb[0].mxu0
        %v687 = vpop.f32.mrb[0].mxu0
        %688 = vdwg.mxu0
        %v689 = vadd.f32 %v633, %v683
        %v690 = vadd.f32 %v634, %v685
        %s691 = scalar_lea.vmem [#allocation5], 32
        %v692 = vld [vmem:[%s691] sm:$0xf]
        %693 = vrot.lane.b32.xlu0 %v254, 86
        %v694 = vpop.permute.xlu0 %693
        %695 = vrot.lane.b32.xlu0 %v255, 86
        %v696 = vpop.permute.xlu0 %695
        %vm697 = vcmask 703488
        %v698 = vsel %vm697, %v694, %v696
        %v702 = vsel %vm264, %v692, 0
        %704 = vmatprep.subr.bf16.mxu0 %v696
        %705 = vmatpush1.bf16.msra.mxu0 %v698
        %706 = vmatprep.subr.bf16.mxu0 0
        %707 = vmatpush1.bf16.msra.mxu0 0
        %708 = vmatprep.subr.bf16.mxu0 0
        %709 = vmatpush1.bf16.msra.mxu0 0
        %710 = vmatprep.subr.bf16.mxu0 0
        %711 = vmatpush1.bf16.msra.mxu0 0
        %712 = vmatprep.subr.bf16.mxu0 0
        %713 = vmatpush1.bf16.msra.mxu0 0
        %714 = vmatprep.subr.bf16.mxu0 0
        %715 = vmatpush1.bf16.msra.mxu0 0
        %716 = vmatprep.subr.bf16.mxu0 0
        %717 = vmatpush1.bf16.msra.mxu0 0
        %718 = vmatprep.subr.bf16.mxu0 0
        %719 = vmatpush1.bf16.msra.mxu0 0
        %720 = vmatprep.subr.bf16.mxu0 0
        %721 = vmatpush1.bf16.msra.mxu0 0
        %722 = vmatprep.subr.bf16.mxu0 0
        %723 = vmatpush1.bf16.msra.mxu0 0
        %724 = vmatprep.subr.bf16.mxu0 0
        %725 = vmatpush1.bf16.msra.mxu0 0
        %726 = vmatprep.subr.bf16.mxu0 0
        %727 = vmatpush1.bf16.msra.mxu0 0
        %728 = vmatprep.subr.bf16.mxu0 0
        %729 = vmatpush1.bf16.msra.mxu0 0
        %730 = vmatprep.subr.bf16.mxu0 0
        %731 = vmatpush1.bf16.msra.mxu0 0
        %732 = vmatprep.subr.bf16.mxu0 0
        %733 = vmatpush1.bf16.msra.mxu0 0
        %734 = vmatprep.subr.bf16.mxu0 0
        %735 = vmatpush1.bf16.msra.mxu0 0
        %736 = vmatprep.mubr.bf16.mxu0 0
        %737 = vmatmul.mubr.bf16.gmra.mrb[0].mxu0 %v702
        %v738 = vpop.f32.mrb[0].mxu0
        %v739 = vadd.f32 0.0, %v738
        %v740 = vpop.f32.mrb[0].mxu0
        %v741 = vadd.f32 0.0, %v740
        %v742 = vpop.f32.mrb[0].mxu0
        %v743 = vpop.f32.mrb[0].mxu0
        %744 = vdwg.mxu0
        %v745 = vadd.f32 %v689, %v739
        %v746 = vadd.f32 %v690, %v741
        %v747 = vld [vmem:[%s2] sm:$0x3]
        %v749 = vlaneseq
        %v750 = vshrl.u32 %v749, 7
        %v751 = vsub.s32 0, %v750
        %v752 = vrot.slane %v747, %v751
        %v753 = vlaneseq
        %v754 = vshrl.u32 %v753, 7
        %v755 = vsub.s32 1, %v754
        %v756 = vrot.slane %v747, %v755
        %v759 = vmul.f32 %v745, %v752
        %v760 = vmul.f32 %v746, %v756
        %v761 = vpack.c.bf16 %v759, %v759
        %v762 = vpack.c.bf16 %v760, %v760
        %v765 = vunpack.c.l.b16 %v761
        %v766 = vunpack.c.l.b16 %v762
        %v767 = vpack.c.b16 %v766, %v765
        %vm769 = vcmask 1043456
        %vm770 = vcmask 424964
        %vm771 = vmor %vm770, %vm769
        %772 = vst.msk [vmem:[%s231] sm:$0xff] %vm771, %v767
        %vm773 = vcmask 424960
        %v774 = vsel %vm773, %v760, 0.0
        %v775 = vadd.f32 %v759, %v774
        %776 = vadd.xlane.f32.xlu0 %v775
        %v777 = vpop.xlane.xlu0 %776
        %vm778 = vcmask 7168
        %779 = vst.msk [vmem:[%s241] sm:$0xff] %vm778, %v777
        %v780 = vmul.f32 %v759, %v759
        %v781 = vmul.f32 %v760, %v760
        %v782 = vsel %vm773, %v781, 0.0
        %v783 = vadd.f32 %v780, %v782
        %784 = vadd.xlane.f32.xlu0 %v783
        %v785 = vpop.xlane.xlu0 %784
        %vm786 = vcmask 15368
        %787 = vst.msk [vmem:[%s241] sm:$0xff] %vm786, %v785
        %s788 = sand.u32 %s99, 1
        %s789 = scalar_lea.sflag [#allocation4], %s788
        %s790 = sand.u32 %s99, 1
        %s791 = smul.addr %s790, 8
        %s792 = scalar_lea.vmem [#allocation7], %s791
        %p793 = scmp.lt.s32.totalorder %s23, 3
        %s794 = scalar_select %p793, %s23, 3
        %s795 = smul.addr %s794, 8
        %s796 = scalar_lea.vmem %s4, %s795
        // Predicated region
        $region41: #{tpu_custom_call.1} parent=31 // pred_check
          %p797 = pneg %p109
        $region42: #{tpu_custom_call.1} parent=31 // pred_check_branch
          %799 = sbr.rel (%p797) target = $region44
        $region43: #{tpu_custom_call.1} parent=31 // pred_region
          %s801 = ssub.s32 128, 128
          %802 = vsyncadd %s789, %s801
          %s803 = smul.addr %s23, 2
          %s804 = smul.addr %s803, 64
          %s805 = scalar_lea.hbm %s3, %s804
          %s807 = sshll.u32 %s792, 4
          %s808 = int_to_ptr.vmem [resolvable:$true] %s807
          %810 = dma.vmem_to_hbm [thread:$0]  %s808, 128, %s805, %s789
        $region44: #{tpu_custom_call.1} parent=31 // pred_fallthru
          _
        // Predicated region
        $region45: #{tpu_custom_call.1} parent=31 // pred_check
          %p811 = pneg %p135
        $region46: #{tpu_custom_call.1} parent=31 // pred_check_branch
          %813 = sbr.rel (%p811) target = $region48
        $region47: #{tpu_custom_call.1} parent=31 // pred_region
          _
        $region48: #{tpu_custom_call.1} parent=31 // pred_fallthru
          _
      $region32: #{tpu_custom_call.1} parent=5 // pred_fallthru
        _
      %p814 = scmp.le.s32.totalorder 2, %s18
      // Predicated region
      $region49: #{tpu_custom_call.1} parent=5 // pred_check
        %p815 = pneg %p814
      $region50: #{tpu_custom_call.1} parent=5 // pred_check_branch
        %817 = sbr.rel (%p815) target = $region52
      $region51: #{tpu_custom_call.1} parent=5 // pred_region
        %s818 = ssub.s32 %s18, 2
        // Predicated region
        $region53: #{tpu_custom_call.1} parent=51 // pred_check
          %p819 = pneg %p115
        $region54: #{tpu_custom_call.1} parent=51 // pred_check_branch
          %821 = sbr.rel (%p819) target = $region56
        $region55: #{tpu_custom_call.1} parent=51 // pred_region
          %s822 = sand.u32 %s100, 1
          %s823 = scalar_lea.sflag [#allocation4], %s822
          %s824 = sand.u32 %s100, 1
          %s825 = smul.addr %s824, 8
          %s826 = scalar_lea.vmem [#allocation7], %s825
          %827 = dma.done %s823, 128
        $region56: #{tpu_custom_call.1} parent=51 // pred_fallthru
          _
        // Predicated region
        $region57: #{tpu_custom_call.1} parent=51 // pred_check
          %p828 = pneg %p141
        $region58: #{tpu_custom_call.1} parent=51 // pred_check_branch
          %830 = sbr.rel (%p828) target = $region60
        $region59: #{tpu_custom_call.1} parent=51 // pred_region
          %p831 = scmp.lt.s32.totalorder %s24, 3
          %s832 = scalar_select %p831, %s24, 3
          %s833 = smul.addr %s832, 8
          %s834 = scalar_lea.vmem %s4, %s833
        $region60: #{tpu_custom_call.1} parent=51 // pred_fallthru
          _
      $region52: #{tpu_custom_call.1} parent=5 // pred_fallthru
        _
    $region6: #{tpu_custom_call.1} parent=1 // loop_footer
      %s22 = sadd.s32 1, %s18
    $region7: #{tpu_custom_call.1} parent=1 // loop_footer_branch
      %17 = sbr.rel target = $region3
    $region8: #{tpu_custom_call.1} parent=1 // loop_exit
      _
    %835 = vsyncpa [#allocation3], 1
    %s836 = scalar_lea.sflag [#allocation3], 1
    %837 = vsyncpa %s836, 1
    %838 = vsyncpa [#allocation6], 1
    %839 = vsyncpa [#allocation4], 1
    %s840 = scalar_lea.sflag [#allocation4], 1
    %841 = vsyncpa %s840, 1

</llo_original>
